<compile_context>
chip_gen: v7x
topology: tpu7x:2x2x1
jax: 0.10.0
libtpu: 0.0.40
codegen_flags: <defaults>
</compile_context>

<pallas_src>
import functools

import jax
import jax.numpy as jnp
import numpy as np
from jax import lax
from jax.experimental import pallas as pl
from jax.experimental.pallas import tpu as pltpu


def _normalize_cdf_kernel(w_ref, wn_ref, cdf_ref):
    """wn = W / row-sum(W);  cdf = row-wise prefix sum of wn.  Runs once."""
    w = w_ref[...]                                       # (n_in, n_out) f32
    s = jnp.sum(w, axis=1, keepdims=True)
    s = jnp.where(s == 0.0, 1.0, s)                      # guard all-zero rows
    wn = w / s
    wn_ref[...] = wn

    n_out = w.shape[1]
    # Prefix sum as one matmul with an upper-triangular ones matrix.  This is
    # executed exactly once per forward (hoisted out of the batch grid), so its
    # O(n_in*n_out^2) cost is negligible, and iota/compare/dot lower cleanly on
    # both Mosaic and the interpreter.
    rows = lax.broadcasted_iota(jnp.int32, (n_out, n_out), 0)
    cols = lax.broadcasted_iota(jnp.int32, (n_out, n_out), 1)
    tri = (rows <= cols).astype(jnp.float32)
    cdf_ref[...] = jnp.dot(wn, tri, preferred_element_type=jnp.float32)


def _route_kernel(cdf_ref, x_ref, u_ref, routes_ref, *, n_out, chunk):
    """Inverse-CDF categorical sampling for one block of batch rows."""
    cdf = cdf_ref[...]                  # (n_in, n_out)   f32
    counts = x_ref[...]                 # (bb, n_in)      int32 ant counts
    u = u_ref[...]                      # (bb, A, n_in)   f32 uniforms in [0,1)
    bb, n_ants, n_in = u.shape

    # idx[b, k, i] = #{ j : u[b, k, i] >= cdf[i, j] }, accumulated over n_out
    # lane chunks so the 4-D compare intermediate stays small in VMEM/vregs.
    idx = jnp.zeros((bb, n_ants, n_in), jnp.int32)
    for j0 in range(0, n_out, chunk):
        c = cdf[:, j0:j0 + chunk]                                  # (n_in, cj)
        idx = idx + jnp.sum(
            (u[:, :, :, None] >= c[None, None, :, :]).astype(jnp.int32),
            axis=-1,
        )
    idx = jnp.minimum(idx, n_out - 1)

    # Mask ant slots beyond the spike count of each (batch, input-node).
    k_iota = lax.broadcasted_iota(jnp.int32, (bb, n_ants, n_in), 1)
    mask = k_iota < counts[:, None, :]
    routes_ref[...] = jnp.where(mask, idx, -1)


class ACOLayerPallas:
    """JAX/Pallas port of the PyTorch ACOLayer forward pass."""

    def __init__(self, n_inputs, n_outputs, rho, relu_cutoff=0, max_ants=4):
        self.n_inputs = n_inputs
        self.n_outputs = n_outputs
        self.rho = rho
        self.relu_cutoff = relu_cutoff
        self.max_ants = max_ants
        # Matches torch.full((n_in, n_out), 1 / n_outputs) in __init__.
        self.weights = jnp.full(
            (n_inputs, n_outputs), 1.0 / n_outputs, dtype=jnp.float32
        )
        self.trail = jnp.zeros_like(self.weights)
        self.input = None

    # Fused normalize + CDF: one kernel launch, one read of the weights.
    def _normalize_and_cdf(self):
        return pl.pallas_call(
            _normalize_cdf_kernel,
            out_shape=(
                jax.ShapeDtypeStruct((self.n_inputs, self.n_outputs), jnp.float32),
                jax.ShapeDtypeStruct((self.n_inputs, self.n_outputs), jnp.float32),
            ),
        )(self.weights)

    def normalize(self):
        wn, _ = self._normalize_and_cdf()
        return wn

    def forward(self, x, key=None):
        # x: (batch, n_in) int32 ant counts; values > max_ants are clamped to
        # the max_ants dense slots (documented divergence from ragged output).
        self.input = x
        bs, n_in = x.shape
        assert n_in == self.n_inputs
        if key is None:
            key = jax.random.PRNGKey(0)

        wn, cdf = self._normalize_and_cdf()

        # TODO(synk): the exact torch.multinomial RNG stream is not
        # reproducible; uniforms are drawn with jax.random (the in-kernel TPU
        # hardware PRNG has no CPU/interpret fallback).
        u = jax.random.uniform(
            key, (bs, self.max_ants, n_in), dtype=jnp.float32
        )

        block_b = min(bs, 8)                     # batch rows per grid step
        chunk = min(self.n_outputs, 128)         # n_out lanes per compare chunk
        grid = (pl.cdiv(bs, block_b),)

        kernel = functools.partial(
            _route_kernel, n_out=self.n_outputs, chunk=chunk
        )
        routes = pl.pallas_call(
            kernel,
            out_shape=jax.ShapeDtypeStruct(
                (bs, self.max_ants, n_in), jnp.int32
            ),
            grid=grid,
            in_specs=[
                # cdf: constant block index -> resident across all grid steps.
                # TODO(synk): for very large (n_in, n_out) layers on v7x, tile
                # n_in with an extra grid axis to respect the 64 MiB VMEM.
                pl.BlockSpec((n_in, self.n_outputs), lambda b: (0, 0)),
                pl.BlockSpec((block_b, n_in), lambda b: (b, 0)),
                pl.BlockSpec((block_b, self.max_ants, n_in), lambda b: (b, 0, 0)),
            ],
            out_specs=pl.BlockSpec(
                (block_b, self.max_ants, n_in), lambda b: (b, 0, 0)
            ),
            compiler_params=pltpu.CompilerParams(
                dimension_semantics=("parallel",)
            ),
        )(cdf, x, u)

        # Lane-dense public layout (batch, max_ants, n_in); no transpose.
        return routes, wn

    # --- parity helpers with the PyTorch module (plain jnp, not kernels) ---
    def relu_func(self, x):
        return jnp.where(x < self.relu_cutoff, 0, x)

    def update_trails(self, ants):
        self.trail = self.trail + ants

    def reset_trails(self):
        self.trail = jnp.zeros_like(self.weights)

    def backward(self):
        self.weights = (1.0 - self.rho) * self.weights + self.rho * self.trail
        self.reset_trails()


if __name__ == "__main__":
    bs, n_in, n_out, max_ants = 2, 8, 16, 4

    key = jax.random.PRNGKey(0)
    kx, ku = jax.random.split(key)
    x = jax.random.randint(kx, (bs, n_in), 0, max_ants + 1, dtype=jnp.int32)

    layer = ACOLayerPallas(n_in, n_out, rho=0.5, max_ants=max_ants)
    routes, wn = layer.forward(x, key=ku)
    routes = jax.block_until_ready(routes)
    wn = jax.block_until_ready(wn)

    # Sanity checks of the forward semantics.
    wn_np = np.asarray(wn)
    assert wn_np.shape == (n_in, n_out)
    assert np.allclose(wn_np.sum(axis=1), 1.0, atol=1e-5)

    r = np.asarray(routes)
    x_np = np.asarray(x)
    assert r.shape == (bs, max_ants, n_in)
    active = np.arange(max_ants)[None, :, None] < x_np[:, None, :]
    assert np.all((r[active] >= 0) & (r[active] < n_out))
    assert np.all(r[~active] == -1)

    print("KERNEL_OK")
</pallas_src>

<mosaic_0001>
module attributes {stable_mosaic.version = 11 : i64} {
  func.func @_normalize_cdf_kernel(%arg0: memref<8x16xf32, #tpu.memory_space<vmem>>, %arg1: memref<8x16xf32, #tpu.memory_space<vmem>>, %arg2: memref<8x16xf32, #tpu.memory_space<vmem>>) attributes {dimension_semantics = [], scalar_prefetch = 0 : i64, scratch_operands = 0 : i64, tpu.core_type = #tpu.core_type<tc>} {
    %c0 = arith.constant 0 : index
    %c0_0 = arith.constant 0 : index
    %0 = vector.load %arg0[%c0, %c0_0] : memref<8x16xf32, #tpu.memory_space<vmem>>, vector<8x16xf32>
    %cst = arith.constant dense<0.000000e+00> : vector<8xf32>
    %1 = vector.multi_reduction <add>, %0, %cst [1] : vector<8x16xf32> to vector<8xf32>
    %2 = vector.shape_cast %1 : vector<8xf32> to vector<8x1xf32>
    %cst_1 = arith.constant 0.000000e+00 : f32
    %3 = vector.broadcast %cst_1 : f32 to vector<8x1xf32>
    %4 = arith.cmpf oeq, %2, %3 : vector<8x1xf32>
    %cst_2 = arith.constant 1.000000e+00 : f32
    %5 = vector.broadcast %cst_2 : f32 to vector<8x1xf32>
    %6 = arith.select %4, %5, %2 : vector<8x1xi1>, vector<8x1xf32>
    %7 = vector.broadcast %6 : vector<8x1xf32> to vector<8x16xf32>
    %8 = arith.divf %0, %7 : vector<8x16xf32>
    %c0_3 = arith.constant 0 : index
    %c0_4 = arith.constant 0 : index
    %9 = vector.load %arg1[%c0_3, %c0_4] : memref<8x16xf32, #tpu.memory_space<vmem>>, vector<8x16xf32>
    tpu.vector_store %arg1[%c0_3, %c0_4], %8 {strides = array<i32>} : memref<8x16xf32, #tpu.memory_space<vmem>>, vector<8x16xf32>,
    %10 = tpu.iota {dimensions = array<i32: 0>} : vector<16x16xi32>
    %11 = tpu.iota {dimensions = array<i32: 1>} : vector<16x16xi32>
    %12 = arith.cmpi sle, %10, %11 : vector<16x16xi32>
    %13 = arith.extui %12 : vector<16x16xi1> to vector<16x16xi32>
    %14 = arith.sitofp %13 : vector<16x16xi32> to vector<16x16xf32>
    %cst_5 = arith.constant dense<0.000000e+00> : vector<8x16xf32>
    %15 = tpu.matmul %8, %14, %cst_5 {dimension_numbers = #tpu.dot_dimension_numbers<[1], [0], [0], [1], [0, 0, 1, 1], [], []>} : vector<8x16xf32>, vector<16x16xf32>, vector<8x16xf32> -> vector<8x16xf32>
    %c0_6 = arith.constant 0 : index
    %c0_7 = arith.constant 0 : index
    %16 = vector.load %arg2[%c0_6, %c0_7] : memref<8x16xf32, #tpu.memory_space<vmem>>, vector<8x16xf32>
    tpu.vector_store %arg2[%c0_6, %c0_7], %15 {strides = array<i32>} : memref<8x16xf32, #tpu.memory_space<vmem>>, vector<8x16xf32>,
    return
  }
}

</mosaic_0001>

<llo_original>
// kernel: tpu_custom_call.1
$region0: #{tpu_custom_call.1}
  #allocation0 [shape = 'u32[]', space=smem, size = 0x4, offset = 0x4, fixed_abs, tag = 'smem constant byte address 0x4 - core index']
  #allocation1 [shape = 'u32[144,128]{1,0:T(1,128)}', space=vmem, size = 0x12000, scoped, tag = 'internal scratch']
  %s0 = inlined_call_operand.hbm [shape: f32[8,16], index: 0, kind: input, shape index: {}]
  %s1 = inlined_call_operand.hbm [shape: f32[8,16], index: 1, kind: output, shape index: {0}]
  %s2 = inlined_call_operand.hbm [shape: f32[8,16], index: 2, kind: output, shape index: {1}]
  %3 = xla_tuple %s1, %s2
  %s4 = sld [smem:[#allocation0]]
  $region26: #{tpu_custom_call.1} parent=0
    _
  %s6 = ssub.s32 1, %s4
  %s7 = scalar_select 0, %s6, %s4
  $region1: #{tpu_custom_call.1} parent=0
    #allocation2 [shape = 'u8[4096]{0}', space=vmem, size = 0x1000, scoped, tag = 'input window, operand 0, single buffered']
    #allocation3 [shape = 's32[1]{0}', space=sflag, size = 0x4, scoped, tag = 'scoped memory for tpu_custom_call.1']
    #allocation4 [shape = 's32[1]{0}', space=sflag, size = 0x4, scoped, tag = 'scoped memory for tpu_custom_call.1']
    #allocation5 [shape = 'u8[4096]{0}', space=vmem, size = 0x1000, scoped, tag = 'output window, operand 0, single buffered']
    #allocation6 [shape = 'u8[4096]{0}', space=vmem, size = 0x1000, scoped, tag = 'output window, operand 1, single buffered']
    #allocation7 [shape = 's32[1]{0}', space=sflag, size = 0x4, scoped, tag = 'scoped memory for tpu_custom_call.1']
    %8 = vsyncpa [#allocation3], 0
    %9 = vsyncpa [#allocation4], 0
    %10 = vsyncpa [#allocation7], 0
    // Predicated region
    $region2: #{tpu_custom_call.1} parent=1 // pred_check
      _
    $region3: #{tpu_custom_call.1} parent=1 // pred_check_branch
      %12 = sbr.rel (0) target = $region5
    $region4: #{tpu_custom_call.1} parent=1 // pred_region
      %s14 = ssub.s32 128, 128
      %15 = vsyncadd [#allocation3], %s14
      %s17 = sshll.u32 [#allocation2], 4
      %s18 = int_to_ptr.vmem [resolvable:$true] %s17
      %20 = dma.hbm_to_vmem [thread:$0]  %s0, 128, %s18, [#allocation3]
    $region5: #{tpu_custom_call.1} parent=1 // pred_fallthru
      _
    // Predicated region
    $region6: #{tpu_custom_call.1} parent=1 // pred_check
      _
    $region7: #{tpu_custom_call.1} parent=1 // pred_check_branch
      %22 = sbr.rel (0) target = $region9
    $region8: #{tpu_custom_call.1} parent=1 // pred_region
      %23 = dma.done [#allocation3], 128
    $region9: #{tpu_custom_call.1} parent=1 // pred_fallthru
      _
    %v24 = vld [vmem:[#allocation2] sm:$0xff]
    %vm25 = vcmask 130048
    %v26 = vsel %vm25, %v24, 0.0
    %27 = vadd.xlane.f32.xlu0 %v26
    %v28 = vpop.xlane.xlu0 %27
    %vm29 = vcmp.eq.f32.partialorder %v28, 0.0
    %v30 = vsel %vm29, 1.0, %v28
    %v31 = vrcp.pop %v30
    %v32 = vmul.f32 %v24, %v31
    %33 = vst.msk [vmem:[#allocation5] sm:$0xff] %vm25, %v32
    %v34 = vlaneseq
    %v35 = vshrl.u32 %v34, 7
    %v36 = vadd.s32 %v35, 8
    %v37 = vlaneseq
    %v38 = vand.u32 %v37, 127
    %vm39 = vcmp.le.s32.totalorder %v35, %v38
    %vm40 = vcmp.le.s32.totalorder %v36, %v38
    %v41 = vsel %vm39, 1, 0
    %v42 = vsel %vm40, 1, 0
    %v43 = vcvt.s32.f32 %v41
    %v44 = vcvt.s32.f32 %v42
    %v46 = vsel %vm25, %v32, 0
    %48 = vmatprep.subr.mxu0 0.0
    %49 = vmatpush1.msra.mxu0 %v43
    %50 = vmatprep.subr.mxu0 0.0
    %51 = vmatpush1.msra.mxu0 %v44
    %52 = vmatprep.subr.mxu0 0.0
    %53 = vmatpush1.msra.mxu0 0.0
    %54 = vmatprep.subr.mxu0 0.0
    %55 = vmatpush1.msra.mxu0 0.0
    %56 = vmatprep.subr.mxu0 0.0
    %57 = vmatpush1.msra.mxu0 0.0
    %58 = vmatprep.subr.mxu0 0.0
    %59 = vmatpush1.msra.mxu0 0.0
    %60 = vmatprep.subr.mxu0 0.0
    %61 = vmatpush1.msra.mxu0 0.0
    %62 = vmatprep.subr.mxu0 0.0
    %63 = vmatpush1.msra.mxu0 0.0
    %64 = vmatprep.subr.mxu0 0.0
    %65 = vmatpush1.msra.mxu0 0.0
    %66 = vmatprep.subr.mxu0 0.0
    %67 = vmatpush1.msra.mxu0 0.0
    %68 = vmatprep.subr.mxu0 0.0
    %69 = vmatpush1.msra.mxu0 0.0
    %70 = vmatprep.subr.mxu0 0.0
    %71 = vmatpush1.msra.mxu0 0.0
    %72 = vmatprep.subr.mxu0 0.0
    %73 = vmatpush1.msra.mxu0 0.0
    %74 = vmatprep.subr.mxu0 0.0
    %75 = vmatpush1.msra.mxu0 0.0
    %76 = vmatprep.subr.mxu0 0.0
    %77 = vmatpush1.msra.mxu0 0.0
    %78 = vmatprep.subr.mxu0 0.0
    %79 = vmatpush1.msra.mxu0 0.0
    %80 = vmatprep.subr.mxu0 0.0
    %81 = vmatpush1.msra.mxu0 0.0
    %82 = vmatprep.subr.mxu0 0.0
    %83 = vmatpush1.msra.mxu0 0.0
    %84 = vmatprep.subr.mxu0 0.0
    %85 = vmatpush1.msra.mxu0 0.0
    %86 = vmatprep.subr.mxu0 0.0
    %87 = vmatpush1.msra.mxu0 0.0
    %88 = vmatprep.subr.mxu0 0.0
    %89 = vmatpush1.msra.mxu0 0.0
    %90 = vmatprep.subr.mxu0 0.0
    %91 = vmatpush1.msra.mxu0 0.0
    %92 = vmatprep.subr.mxu0 0.0
    %93 = vmatpush1.msra.mxu0 0.0
    %94 = vmatprep.subr.mxu0 0.0
    %95 = vmatpush1.msra.mxu0 0.0
    %96 = vmatprep.subr.mxu0 0.0
    %97 = vmatpush1.msra.mxu0 0.0
    %98 = vmatprep.subr.mxu0 0.0
    %99 = vmatpush1.msra.mxu0 0.0
    %100 = vmatprep.subr.mxu0 0.0
    %101 = vmatpush1.msra.mxu0 0.0
    %102 = vmatprep.subr.mxu0 0.0
    %103 = vmatpush1.msra.mxu0 0.0
    %104 = vmatprep.subr.mxu0 0.0
    %105 = vmatpush1.msra.mxu0 0.0
    %106 = vmatprep.subr.mxu0 0.0
    %107 = vmatpush1.msra.mxu0 0.0
    %108 = vmatprep.subr.mxu0 0.0
    %109 = vmatpush1.msra.mxu0 0.0
    %110 = vmatprep.subr.mxu0 0.0
    %111 = vmatpush1.msra.mxu0 0.0
    %112 = vmatprep.mubr.f32.mxu0 0.0
    %113 = vmatmul.mubr.f32.gmra.mrb[0].mxu0 %v46
    %v114 = vpop.f32.mrb[0].mxu0
    %v115 = vadd.f32 0.0, %v114
    %v116 = vpop.f32.mrb[0].mxu0
    %117 = vdwg.mxu0
    %118 = vst.msk [vmem:[#allocation6] sm:$0xff] %vm25, %v115
    // Predicated region
    $region10: #{tpu_custom_call.1} parent=1 // pred_check
      _
    $region11: #{tpu_custom_call.1} parent=1 // pred_check_branch
      %120 = sbr.rel (0) target = $region13
    $region12: #{tpu_custom_call.1} parent=1 // pred_region
      %s122 = ssub.s32 128, 128
      %123 = vsyncadd [#allocation4], %s122
      %s125 = sshll.u32 [#allocation5], 4
      %s126 = int_to_ptr.vmem [resolvable:$true] %s125
      %128 = dma.vmem_to_hbm [thread:$0]  %s126, 128, %s1, [#allocation4]
    $region13: #{tpu_custom_call.1} parent=1 // pred_fallthru
      _
    // Predicated region
    $region14: #{tpu_custom_call.1} parent=1 // pred_check
      _
    $region15: #{tpu_custom_call.1} parent=1 // pred_check_branch
      %130 = sbr.rel (0) target = $region17
    $region16: #{tpu_custom_call.1} parent=1 // pred_region
      %s132 = ssub.s32 128, 128
      %133 = vsyncadd [#allocation7], %s132
      %s135 = sshll.u32 [#allocation6], 4
      %s136 = int_to_ptr.vmem [resolvable:$true] %s135
      %138 = dma.vmem_to_hbm [thread:$0]  %s136, 128, %s2, [#allocation7]
    $region17: #{tpu_custom_call.1} parent=1 // pred_fallthru
      _
    // Predicated region
    $region18: #{tpu_custom_call.1} parent=1 // pred_check
      _
    $region19: #{tpu_custom_call.1} parent=1 // pred_check_branch
      %140 = sbr.rel (0) target = $region21
    $region20: #{tpu_custom_call.1} parent=1 // pred_region
      %141 = dma.done [#allocation4], 128
    $region21: #{tpu_custom_call.1} parent=1 // pred_fallthru
      _
    // Predicated region
    $region22: #{tpu_custom_call.1} parent=1 // pred_check
      _
    $region23: #{tpu_custom_call.1} parent=1 // pred_check_branch
      %143 = sbr.rel (0) target = $region25
    $region24: #{tpu_custom_call.1} parent=1 // pred_region
      %144 = dma.done [#allocation7], 128
    $region25: #{tpu_custom_call.1} parent=1 // pred_fallthru
      _
    %145 = vsyncpa [#allocation3], 1
    %146 = vsyncpa [#allocation4], 1
    %147 = vsyncpa [#allocation7], 1

</llo_original>
